<compile_context>
chip_gen: v5e
topology: v5e:2x2
jax: 0.10.0
libtpu: 0.0.40
codegen_flags: <defaults>
</compile_context>

<pallas_src>
import jax
import jax.numpy as jnp
from jax.experimental import pallas as pl
from jax.experimental.pallas import tpu as pltpu

KERNEL = 3
STRIDE = 3                      # nn.MaxPool2d default: stride = kernel_size


def _cdiv(a, b):
    return -(-a // b)


def _sublane_multiple(itemsize):
    # Packed sublane tile: 8 for 4-byte, 16 for 2-byte, 32 for 1-byte dtypes.
    return max(8, 32 // max(int(itemsize), 1))


def _vmem_budget_and_limit():
    """(per-input-block byte budget, vmem_limit_bytes) sized to the chip generation."""
    try:
        info = pltpu.get_tpu_info()
        cap = int(getattr(info, "vmem_capacity_bytes", 64 << 20))
    except Exception:
        cap = 64 << 20                       # conservative (v7x-sized) default
    budget = max(4 << 20, min(cap // 4, 32 << 20))
    limit = int(min(cap * 3 // 4, 96 << 20))
    return budget, limit


def _choose_tile_ho(ho, w, itemsize, budget, sub):
    """Output rows produced per grid step (input rows read = 3x this)."""
    if 3 * ho * w * itemsize <= budget:
        return ho                            # whole plane per step
    if ho <= sub:
        return ho
    max_t = max(sub, (budget // (3 * w * itemsize)) // sub * sub)
    max_t = min(max_t, (ho // sub) * sub)
    best_div = 0
    t = sub
    while t <= max_t:                        # prefer a divisor (no partial block)
        if ho % t == 0:
            best_div = t
        t += sub
    # Non-divisor fallback: partial trailing block (masked) instead of whole plane,
    # so the double-buffered block can never exceed the VMEM limit (v7x-safe).
    return best_div if best_div > 0 else max_t


def _make_maxpool_kernel(tile_ho, wo):
    def kernel(x_ref, o_ref, t_ref):
        # x_ref: (tile_nc, blk_h, W)   H on sublanes, W on lanes
        # o_ref: (tile_nc, tile_ho, wo)
        # t_ref: (tile_nc, W, tile_ho) VMEM scratch (W on sublanes)
        # ---- H-window reduce: three stride-3 sublane loads + bulk VPU maxima.
        #      (slice-only indexers: required by the discharge/interpret path and
        #       the documented hardware strided-load path.)
        h0 = x_ref[:, pl.ds(0, tile_ho, stride=3), :]
        h1 = x_ref[:, pl.ds(1, tile_ho, stride=3), :]
        h2 = x_ref[:, pl.ds(2, tile_ho, stride=3), :]
        hmax = jnp.maximum(jnp.maximum(h0, h1), h2)          # (tile_nc, tile_ho, W)
        # ---- Put W on sublanes (in-VMEM XLU transpose), then W-window reduce.
        t_ref[...] = jnp.swapaxes(hmax, 1, 2)                 # (tile_nc, W, tile_ho)
        w0 = t_ref[:, pl.ds(0, wo, stride=3), :]
        w1 = t_ref[:, pl.ds(1, wo, stride=3), :]
        w2 = t_ref[:, pl.ds(2, wo, stride=3), :]
        wmax = jnp.maximum(jnp.maximum(w0, w1), w2)           # (tile_nc, wo, tile_ho)
        # ---- Single bulk store of the whole output block.
        o_ref[...] = jnp.swapaxes(wmax, 1, 2)                 # (tile_nc, tile_ho, wo)
    return kernel


def maxpool2d_k3(x_nchw):
    """MaxPool2d(kernel_size=3, ceil_mode=False) on an NCHW tensor."""
    N, C, H, W = x_nchw.shape
    ho = (H - KERNEL) // STRIDE + 1
    wo = (W - KERNEL) // STRIDE + 1
    if ho <= 0 or wo <= 0:
        # Degenerate spatial dims (PyTorch would error); return empty output.
        return jnp.zeros((N, C, max(ho, 0), max(wo, 0)), x_nchw.dtype)

    nc = N * C
    x = x_nchw.reshape(nc, H, W)                 # free: no data movement
    itemsize = jnp.dtype(x_nchw.dtype).itemsize
    sub = _sublane_multiple(itemsize)
    budget, vmem_limit = _vmem_budget_and_limit()

    # TODO(synk): for packed dtypes (bf16/int8) stride-3 sublane loads may force a
    # relayout; the tiles respect the packed sublane multiple but the loads are not
    # further specialized.
    tile_ho = _choose_tile_ho(ho, W, itemsize, budget, sub)
    n_h = _cdiv(ho, tile_ho)
    blk_h = H if n_h == 1 else 3 * tile_ho       # full extent or multiple of 8

    # ---- Batch N*C planes per grid step: large contiguous DMAs, fewer grid steps.
    blk_bytes = blk_h * W * itemsize
    tile_nc = max(1, min(nc, budget // max(blk_bytes, 1)))

    # Keep total per-step VMEM (2x in + scratch + 2x out, with layout padding) under
    # ~80% of the scoped limit.
    def _padded(rows, cols):
        return ((rows + 7) // 8) * 8 * max(((cols + 127) // 128) * 128, 128)
    per_plane = (2 * _padded(blk_h, W) + _padded(W, tile_ho)
                 + 2 * _padded(tile_ho, wo)) * itemsize
    tile_nc = max(1, min(tile_nc, (vmem_limit * 4 // 5) // max(per_plane, 1)))
    n_nc = _cdiv(nc, tile_nc)

    # Megacore (v7x): if everything collapsed into one grid step, split the plane
    # axis so both TensorCores get work.
    if n_nc * n_h == 1 and nc >= 2:
        tile_nc = _cdiv(nc, 2)
        n_nc = _cdiv(nc, tile_nc)

    # TODO(synk): pathologically wide planes with tiny HO would want W-tiling too
    # (the (tile_nc, W, tile_ho) scratch pads its lane dim to 128); not needed here.

    bytes_accessed = nc * (blk_h * W + ho * wo) * itemsize
    cost = pl.CostEstimate(flops=8 * nc * ho * wo, transcendentals=0,
                           bytes_accessed=bytes_accessed)

    out = pl.pallas_call(
        _make_maxpool_kernel(tile_ho, wo),
        out_shape=jax.ShapeDtypeStruct((nc, ho, wo), x_nchw.dtype),
        grid=(n_nc, n_h),
        in_specs=[pl.BlockSpec((tile_nc, blk_h, W), lambda n, h: (n, h, 0))],
        out_specs=pl.BlockSpec((tile_nc, tile_ho, wo), lambda n, h: (n, h, 0)),
        scratch_shapes=[pltpu.VMEM((tile_nc, W, tile_ho), x_nchw.dtype)],
        compiler_params=pltpu.CompilerParams(
            dimension_semantics=("parallel", "parallel"),
            vmem_limit_bytes=int(vmem_limit)),
        cost_estimate=cost,
    )(x)
    return out.reshape(N, C, ho, wo)


def _reference_maxpool2d_k3(x_nchw):
    """Pure-JAX reference (floor mode: crop, reshape, reduce)."""
    N, C, H, W = x_nchw.shape
    ho = (H - KERNEL) // STRIDE + 1
    wo = (W - KERNEL) // STRIDE + 1
    cropped = x_nchw[:, :, :ho * STRIDE, :wo * STRIDE]
    r = cropped.reshape(N, C, ho, KERNEL, wo, KERNEL)
    return jnp.max(r, axis=(3, 5))


if __name__ == "__main__":
    key = jax.random.PRNGKey(0)
    # Small NCHW batch consistent with the module: (N=2, C=4, H=16, W=16)
    x = jax.random.normal(key, (2, 4, 16, 16), dtype=jnp.float32)

    y = maxpool2d_k3(x)
    y = jax.block_until_ready(y)

    assert y.shape == (2, 4, 5, 5), y.shape
    ref = _reference_maxpool2d_k3(x)
    assert jnp.allclose(y, ref), "Pallas maxpool mismatch vs reference"

    print("KERNEL_OK")
</pallas_src>

<mosaic_0001>
module attributes {stable_mosaic.version = 11 : i64} {
  func.func @kernel(%arg0: i32, %arg1: i32, %arg2: memref<4x16x16xf32, #tpu.memory_space<vmem>>, %arg3: memref<4x5x5xf32, #tpu.memory_space<vmem>>, %arg4: memref<4x16x5xf32, #tpu.memory_space<vmem>>) attributes {dimension_semantics = [#tpu.dimension_semantics<parallel>, #tpu.dimension_semantics<parallel>], iteration_bounds = array<i64: 2, 1>, scalar_prefetch = 0 : i64, scratch_operands = 1 : i64, tpu.core_type = #tpu.core_type<tc>, window_params = [{transform_indices = @transform_0, window_bounds = array<i64: 4, 16, 16>}, {transform_indices = @transform_1, window_bounds = array<i64: 4, 5, 5>}]} {
    %c0 = arith.constant 0 : index
    %c0_0 = arith.constant 0 : index
    %c0_1 = arith.constant 0 : index
    %0 = tpu.strided_load %arg2[%c0, %c0_0, %c0_1] {strides = array<i32: 1, 3, 1>} : memref<4x16x16xf32, #tpu.memory_space<vmem>>, vector<4x5x16xf32>
    %c0_2 = arith.constant 0 : index
    %c1 = arith.constant 1 : index
    %c0_3 = arith.constant 0 : index
    %1 = tpu.strided_load %arg2[%c0_2, %c1, %c0_3] {strides = array<i32: 1, 3, 1>} : memref<4x16x16xf32, #tpu.memory_space<vmem>>, vector<4x5x16xf32>
    %c0_4 = arith.constant 0 : index
    %c2 = arith.constant 2 : index
    %c0_5 = arith.constant 0 : index
    %2 = tpu.strided_load %arg2[%c0_4, %c2, %c0_5] {strides = array<i32: 1, 3, 1>} : memref<4x16x16xf32, #tpu.memory_space<vmem>>, vector<4x5x16xf32>
    %3 = arith.maximumf %0, %1 : vector<4x5x16xf32>
    %4 = arith.maximumf %3, %2 : vector<4x5x16xf32>
    %5 = tpu.transpose %4, [0, 2, 1] : vector<4x5x16xf32> -> vector<4x16x5xf32>
    %c0_6 = arith.constant 0 : index
    %c0_7 = arith.constant 0 : index
    %c0_8 = arith.constant 0 : index
    %6 = vector.load %arg4[%c0_6, %c0_7, %c0_8] : memref<4x16x5xf32, #tpu.memory_space<vmem>>, vector<4x16x5xf32>
    tpu.vector_store %arg4[%c0_6, %c0_7, %c0_8], %5 {strides = array<i32>} : memref<4x16x5xf32, #tpu.memory_space<vmem>>, vector<4x16x5xf32>,
    %c0_9 = arith.constant 0 : index
    %c0_10 = arith.constant 0 : index
    %c0_11 = arith.constant 0 : index
    %7 = tpu.strided_load %arg4[%c0_9, %c0_10, %c0_11] {strides = array<i32: 1, 3, 1>} : memref<4x16x5xf32, #tpu.memory_space<vmem>>, vector<4x5x5xf32>
    %c0_12 = arith.constant 0 : index
    %c1_13 = arith.constant 1 : index
    %c0_14 = arith.constant 0 : index
    %8 = tpu.strided_load %arg4[%c0_12, %c1_13, %c0_14] {strides = array<i32: 1, 3, 1>} : memref<4x16x5xf32, #tpu.memory_space<vmem>>, vector<4x5x5xf32>
    %c0_15 = arith.constant 0 : index
    %c2_16 = arith.constant 2 : index
    %c0_17 = arith.constant 0 : index
    %9 = tpu.strided_load %arg4[%c0_15, %c2_16, %c0_17] {strides = array<i32: 1, 3, 1>} : memref<4x16x5xf32, #tpu.memory_space<vmem>>, vector<4x5x5xf32>
    %10 = arith.maximumf %7, %8 : vector<4x5x5xf32>
    %11 = arith.maximumf %10, %9 : vector<4x5x5xf32>
    %12 = tpu.transpose %11, [0, 2, 1] : vector<4x5x5xf32> -> vector<4x5x5xf32>
    %c0_18 = arith.constant 0 : index
    %c0_19 = arith.constant 0 : index
    %c0_20 = arith.constant 0 : index
    %13 = vector.load %arg3[%c0_18, %c0_19, %c0_20] : memref<4x5x5xf32, #tpu.memory_space<vmem>>, vector<4x5x5xf32>
    tpu.vector_store %arg3[%c0_18, %c0_19, %c0_20], %12 {strides = array<i32>} : memref<4x5x5xf32, #tpu.memory_space<vmem>>, vector<4x5x5xf32>,
    return
  }
  func.func @transform_0(%arg0: i32, %arg1: i32) -> (i32, i32, i32) {
    %c0_i32 = arith.constant 0 : i32
    %c0_i32_0 = arith.constant 0 : i32
    return %arg0, %arg1, %c0_i32 : i32, i32, i32
  }
  func.func @transform_1(%arg0: i32, %arg1: i32) -> (i32, i32, i32) {
    %c0_i32 = arith.constant 0 : i32
    %c0_i32_0 = arith.constant 0 : i32
    return %arg0, %arg1, %c0_i32 : i32, i32, i32
  }
}

</mosaic_0001>

<llo_original>
// kernel: tpu_custom_call.1
$region0: #{tpu_custom_call.1}
  #allocation0 [shape = 'u32[]', space=smem, size = 0x4, offset = 0x4, fixed_abs, tag = 'smem constant byte address 0x4 - core index']
  #allocation1 [shape = 'u32[72,128]{1,0:T(1,128)}', space=vmem, size = 0x9000, scoped, tag = 'internal scratch']
  #allocation2 [shape = 'f32[4,16,5]{2,1,0:T(8,128)}', space=vmem, size = 0x8000, scoped, tag = 'scratch operand']
  %s0 = inlined_call_operand.hbm [shape: f32[8,16,16], index: 0, kind: input, shape index: {}]
  %s1 = inlined_call_operand.vmem [shape: f32[8,5,5], index: 1, kind: output, shape index: {}]
  %s2 = sld [smem:[#allocation0]]
  $region41: #{tpu_custom_call.1} parent=0
    _
  %s4 = ssub.s32 1, %s2
  %s5 = scalar_select 0, %s4, %s2
  $region1: #{tpu_custom_call.1} parent=0
    #allocation3 [shape = 'u8[65536]{0}', space=vmem, size = 0x10000, scoped, tag = 'input window, operand 0']
    #allocation4 [shape = 's32[2]{0}', space=sflag, size = 0x8, scoped, tag = 'scoped memory for tpu_custom_call.1']
    %6 = vsyncpa [#allocation4], 0
    %s7 = scalar_lea.sflag [#allocation4], 1
    %8 = vsyncpa %s7, 0
    loop: start=0, step=1, limit=4
    $region2: #{tpu_custom_call.1} parent=1 // loop_pre_header
      _
    $region3: #{tpu_custom_call.1} parent=1 // loop_header
      %s10 = sphi 0, %s14
      %p11 = scmp.ge.s32.totalorder %s10, 4
      %s17 = sphi 0, %s29
      %s18 = sphi 0, %s25
      %s19 = sphi 0, %s17
      %s20 = sphi 0, %s18
      %s21 = sphi 0, %s19
      %s22 = sphi 0, %s20
      %s34 = sphi 0, %s36
      %s37 = sphi 0, %s34
      %s38 = sphi 0, %s37
      %s54 = sphi 0, %s38
      %s62 = sphi 0, %s64
      %s65 = sphi 0, %s62
      %s66 = sphi 0, %s65
      %s82 = sphi 0, %s66
    $region4: #{tpu_custom_call.1} parent=1 // loop_header_branch
      %13 = sbr.rel (%p11) target = $region8
    $region5: #{tpu_custom_call.1} parent=1 // loop_body
      %s15 = ssub.s32 %s10, 1
      %s16 = ssub.s32 %s10, 2
      %s23 = sadd.s32 1, %s18
      %p24 = scmp.ge.s32.totalorder %s23, 1
      %s25 = scalar_select %p24, 0, %s23
      %s26 = sadd.s32 1, %s17
      %s27 = scalar_select %p24, %s26, %s17
      %p28 = scmp.ge.s32.totalorder %s27, 2
      %s29 = scalar_select %p28, 0, %s27
      %s30 = ssub.s32 %s17, %s29
      %s31 = ssub.s32 %s18, %s25
      %s32 = sor.u32 %s30, %s31
      %p33 = scmp.eq.s32.totalorder %s32, 0
      %s35 = sadd.s32 %s34, 1
      %s36 = scalar_select %p33, %s34, %s35
      %p39 = pneg %p33
      %p40 = scmp.eq.s32.totalorder %s10, 1
      %p41 = por %p39, %p40
      %p42 = scmp.ne.s32.totalorder %s34, %s37
      %p43 = scmp.eq.s32.totalorder %s10, 0
      %p44 = por %p42, %p43
      %p45 = scmp.ne.s32.totalorder %s34, %s37
      %p46 = scmp.eq.s32.totalorder %s15, 1
      %p47 = por %p45, %p46
      %p48 = scmp.ne.s32.totalorder %s37, %s38
      %p49 = scmp.eq.s32.totalorder %s15, 0
      %p50 = por %p48, %p49
      %p51 = scmp.ne.s32.totalorder %s37, %s38
      %p52 = scmp.eq.s32.totalorder %s16, 1
      %p53 = por %p51, %p52
      %p55 = scmp.ne.s32.totalorder %s38, %s54
      %p56 = scmp.eq.s32.totalorder %s16, 0
      %p57 = por %p55, %p56
      %s58 = ssub.s32 %s17, %s29
      %s59 = ssub.s32 %s18, %s25
      %s60 = sor.u32 %s58, %s59
      %p61 = scmp.eq.s32.totalorder %s60, 0
      %s63 = sadd.s32 %s62, 1
      %s64 = scalar_select %p61, %s62, %s63
      %p67 = pneg %p61
      %p68 = scmp.eq.s32.totalorder %s10, 1
      %p69 = por %p67, %p68
      %p70 = scmp.ne.s32.totalorder %s62, %s65
      %p71 = scmp.eq.s32.totalorder %s10, 0
      %p72 = por %p70, %p71
      %p73 = scmp.ne.s32.totalorder %s62, %s65
      %p74 = scmp.eq.s32.totalorder %s15, 1
      %p75 = por %p73, %p74
      %p76 = scmp.ne.s32.totalorder %s65, %s66
      %p77 = scmp.eq.s32.totalorder %s15, 0
      %p78 = por %p76, %p77
      %p79 = scmp.ne.s32.totalorder %s65, %s66
      %p80 = scmp.eq.s32.totalorder %s16, 1
      %p81 = por %p79, %p80
      %p83 = scmp.ne.s32.totalorder %s66, %s82
      %p84 = scmp.eq.s32.totalorder %s16, 0
      %p85 = por %p83, %p84
      %p86 = scmp.le.s32.totalorder 1, %s10
      %p87 = scmp.lt.s32.totalorder %s10, 3
      %p88 = pnand %p86, %p87
      %p89 = pneg %p88
      // Predicated region
      $region9: #{tpu_custom_call.1} parent=5 // pred_check
        _
      $region10: #{tpu_custom_call.1} parent=5 // pred_check_branch
        %91 = sbr.rel (%p88) target = $region12
      $region11: #{tpu_custom_call.1} parent=5 // pred_region
        %s92 = ssub.s32 %s10, 1
      $region12: #{tpu_custom_call.1} parent=5 // pred_fallthru
        _
      %p93 = scmp.lt.s32.totalorder %s10, 2
      // Predicated region
      $region13: #{tpu_custom_call.1} parent=5 // pred_check
        %p94 = pneg %p93
      $region14: #{tpu_custom_call.1} parent=5 // pred_check_branch
        %96 = sbr.rel (%p94) target = $region16
      $region15: #{tpu_custom_call.1} parent=5 // pred_region
        // Predicated region
        $region17: #{tpu_custom_call.1} parent=15 // pred_check
          %p97 = pneg %p44
        $region18: #{tpu_custom_call.1} parent=15 // pred_check_branch
          %99 = sbr.rel (%p97) target = $region20
        $region19: #{tpu_custom_call.1} parent=15 // pred_region
          %s100 = sand.u32 %s34, 1
          %s101 = scalar_lea.sflag [#allocation4], %s100
          %s102 = sand.u32 %s34, 1
          %s103 = smul.addr %s102, 64
          %s104 = scalar_lea.vmem [#allocation3], %s103
          %s105 = smul.u32 4, %s17
          %s106 = smul.u32 2, %s18
          %108 = vsyncadd %s101, 0
          %s109 = smul.addr %s105, 2
          %s110 = sadd.s32 %s106, %s109
          %s111 = smul.addr %s110, 8
          %s112 = scalar_lea.hbm %s0, %s111
          %s113 = sshll.u32 %s112, 4
          %s114 = int_to_ptr.hbm [resolvable:$true] %s113
          %s115 = sshll.u32 %s104, 4
          %s116 = int_to_ptr.vmem [resolvable:$true] %s115
          %121 = dma.hbm_to_vmem [thread:$0]  %s114, 1024, %s116, %s101, 128, 128, 8
        $region20: #{tpu_custom_call.1} parent=15 // pred_fallthru
          _
      $region16: #{tpu_custom_call.1} parent=5 // pred_fallthru
        _
      %p122 = scmp.le.s32.totalorder 1, %s10
      %p123 = scmp.lt.s32.totalorder %s10, 3
      %p124 = pnand %p122, %p123
      %p125 = pneg %p124
      // Predicated region
      $region21: #{tpu_custom_call.1} parent=5 // pred_check
        _
      $region22: #{tpu_custom_call.1} parent=5 // pred_check_branch
        %127 = sbr.rel (%p124) target = $region24
      $region23: #{tpu_custom_call.1} parent=5 // pred_region
        %s128 = ssub.s32 %s10, 1
        %s129 = sand.u32 %s37, 1
        %s130 = scalar_lea.sflag [#allocation4], %s129
        %s131 = sand.u32 %s37, 1
        %s132 = smul.addr %s131, 64
        %s133 = scalar_lea.vmem [#allocation3], %s132
        // Predicated region
        $region25: #{tpu_custom_call.1} parent=23 // pred_check
          %p134 = pneg %p50
        $region26: #{tpu_custom_call.1} parent=23 // pred_check_branch
          %136 = sbr.rel (%p134) target = $region28
        $region27: #{tpu_custom_call.1} parent=23 // pred_region
          %138 = dma.done %s130, 1024
        $region28: #{tpu_custom_call.1} parent=23 // pred_fallthru
          _
        %s139 = sand.u32 %s37, 1
        %s140 = scalar_lea.sflag [#allocation4], %s139
        %s141 = sand.u32 %s37, 1
        %s142 = smul.addr %s141, 64
        %s143 = scalar_lea.vmem [#allocation3], %s142
        %p144 = pneg %p50
        %p145 = pneg %p47
        %p146 = pneg %p78
        %p147 = pneg %p75
        %s148 = smul.u32 4, %s19
        %p149 = scmp.lt.s32.totalorder %s148, 7
        %s150 = scalar_select %p149, %s148, 7
        %p151 = scmp.lt.s32.totalorder %s20, 0
        %s152 = scalar_select %p151, %s20, 0
        %s153 = sadd.s32 %s152, %s150
        %s154 = smul.addr %s153, 8
        %s155 = scalar_lea.vmem %s1, %s154
        %s156 = smul.u32 4, %s19
        %s157 = smul.u32 2, %s20
        %s158 = smul.u32 4, %s19
        %p159 = scmp.lt.s32.totalorder %s158, 7
        %s160 = scalar_select %p159, %s158, 7
        %p161 = scmp.lt.s32.totalorder %s20, 0
        %s162 = scalar_select %p161, %s20, 0
        %s163 = sadd.s32 %s162, %s160
        %s164 = smul.addr %s163, 8
        %s165 = scalar_lea.vmem %s1, %s164
        %s166 = smul.u32 4, %s19
        %v167 = vld [vmem:[%s133] ss:$3 sm:$0x1f]
        %s168 = scalar_lea.vmem %s133, 16 [#allocation3]
        %v169 = vld [vmem:[%s168] ss:$3 sm:$0x1f]
        %s170 = scalar_lea.vmem %s133, 32 [#allocation3]
        %v171 = vld [vmem:[%s170] ss:$3 sm:$0x1f]
        %s172 = scalar_lea.vmem %s133, 48 [#allocation3]
        %v173 = vld [vmem:[%s172] ss:$3 sm:$0x1f]
        %s174 = scalar_lea.vmem %s133, 1 [#allocation3]
        %v175 = vld [vmem:[%s174] ss:$3 sm:$0x1f]
        %s176 = scalar_lea.vmem %s133, 17 [#allocation3]
        %v177 = vld [vmem:[%s176] ss:$3 sm:$0x1f]
        %s178 = scalar_lea.vmem %s133, 33 [#allocation3]
        %v179 = vld [vmem:[%s178] ss:$3 sm:$0x1f]
        %s180 = scalar_lea.vmem %s133, 49 [#allocation3]
        %v181 = vld [vmem:[%s180] ss:$3 sm:$0x1f]
        %s182 = scalar_lea.vmem %s133, 2 [#allocation3]
        %v183 = vld [vmem:[%s182] ss:$3 sm:$0x1f]
        %s184 = scalar_lea.vmem %s133, 18 [#allocation3]
        %v185 = vld [vmem:[%s184] ss:$3 sm:$0x1f]
        %s186 = scalar_lea.vmem %s133, 34 [#allocation3]
        %v187 = vld [vmem:[%s186] ss:$3 sm:$0x1f]
        %s188 = scalar_lea.vmem %s133, 50 [#allocation3]
        %v189 = vld [vmem:[%s188] ss:$3 sm:$0x1f]
        %v190 = vmax.f32 %v167, %v175
        %v191 = vmax.f32 %v169, %v177
        %v192 = vmax.f32 %v171, %v179
        %v193 = vmax.f32 %v173, %v181
        %v194 = vmax.f32 %v190, %v183
        %v195 = vmax.f32 %v191, %v185
        %v196 = vmax.f32 %v192, %v187
        %v197 = vmax.f32 %v193, %v189
        %198 = vxpose.xlu0.b32.start [1/16] %v194, 128
        %199 = vxpose.xlu0.b32.cont [2/16] 0.0, 128
        %200 = vxpose.xlu0.b32.cont [3/16] 0.0, 128
        %201 = vxpose.xlu0.b32.cont [4/16] 0.0, 128
        %202 = vxpose.xlu0.b32.cont [5/16] 0.0, 128
        %203 = vxpose.xlu0.b32.cont [6/16] 0.0, 128
        %204 = vxpose.xlu0.b32.cont [7/16] 0.0, 128
        %205 = vxpose.xlu0.b32.cont [8/16] 0.0, 128
        %206 = vxpose.xlu0.b32.cont [9/16] 0.0, 128
        %207 = vxpose.xlu0.b32.cont [10/16] 0.0, 128
        %208 = vxpose.xlu0.b32.cont [11/16] 0.0, 128
        %209 = vxpose.xlu0.b32.cont [12/16] 0.0, 128
        %210 = vxpose.xlu0.b32.cont [13/16] 0.0, 128
        %211 = vxpose.xlu0.b32.cont [14/16] 0.0, 128
        %212 = vxpose.xlu0.b32.cont [15/16] 0.0, 128
        %213 = vxpose.xlu0.b32.end [16/16] 0.0, 128
        %v214 = vpop.trf.xlu0
        %v215 = vpop.trf.xlu0
        %v216 = vpop.trf.xlu0
        %v217 = vpop.trf.xlu0
        %v218 = vpop.trf.xlu0
        %v219 = vpop.trf.xlu0
        %v220 = vpop.trf.xlu0
        %v221 = vpop.trf.xlu0
        %v222 = vpop.trf.xlu0
        %v223 = vpop.trf.xlu0
        %v224 = vpop.trf.xlu0
        %v225 = vpop.trf.xlu0
        %v226 = vpop.trf.xlu0
        %v227 = vpop.trf.xlu0
        %v228 = vpop.trf.xlu0
        %v229 = vpop.trf.xlu0
        %230 = vxpose.xlu0.b32.start [1/16] %v195, 128
        %231 = vxpose.xlu0.b32.cont [2/16] 0.0, 128
        %232 = vxpose.xlu0.b32.cont [3/16] 0.0, 128
        %233 = vxpose.xlu0.b32.cont [4/16] 0.0, 128
        %234 = vxpose.xlu0.b32.cont [5/16] 0.0, 128
        %235 = vxpose.xlu0.b32.cont [6/16] 0.0, 128
        %236 = vxpose.xlu0.b32.cont [7/16] 0.0, 128
        %237 = vxpose.xlu0.b32.cont [8/16] 0.0, 128
        %238 = vxpose.xlu0.b32.cont [9/16] 0.0, 128
        %239 = vxpose.xlu0.b32.cont [10/16] 0.0, 128
        %240 = vxpose.xlu0.b32.cont [11/16] 0.0, 128
        %241 = vxpose.xlu0.b32.cont [12/16] 0.0, 128
        %242 = vxpose.xlu0.b32.cont [13/16] 0.0, 128
        %243 = vxpose.xlu0.b32.cont [14/16] 0.0, 128
        %244 = vxpose.xlu0.b32.cont [15/16] 0.0, 128
        %245 = vxpose.xlu0.b32.end [16/16] 0.0, 128
        %v246 = vpop.trf.xlu0
        %v247 = vpop.trf.xlu0
        %v248 = vpop.trf.xlu0
        %v249 = vpop.trf.xlu0
        %v250 = vpop.trf.xlu0
        %v251 = vpop.trf.xlu0
        %v252 = vpop.trf.xlu0
        %v253 = vpop.trf.xlu0
        %v254 = vpop.trf.xlu0
        %v255 = vpop.trf.xlu0
        %v256 = vpop.trf.xlu0
        %v257 = vpop.trf.xlu0
        %v258 = vpop.trf.xlu0
        %v259 = vpop.trf.xlu0
        %v260 = vpop.trf.xlu0
        %v261 = vpop.trf.xlu0
        %262 = vxpose.xlu0.b32.start [1/16] %v196, 128
        %263 = vxpose.xlu0.b32.cont [2/16] 0.0, 128
        %264 = vxpose.xlu0.b32.cont [3/16] 0.0, 128
        %265 = vxpose.xlu0.b32.cont [4/16] 0.0, 128
        %266 = vxpose.xlu0.b32.cont [5/16] 0.0, 128
        %267 = vxpose.xlu0.b32.cont [6/16] 0.0, 128
        %268 = vxpose.xlu0.b32.cont [7/16] 0.0, 128
        %269 = vxpose.xlu0.b32.cont [8/16] 0.0, 128
        %270 = vxpose.xlu0.b32.cont [9/16] 0.0, 128
        %271 = vxpose.xlu0.b32.cont [10/16] 0.0, 128
        %272 = vxpose.xlu0.b32.cont [11/16] 0.0, 128
        %273 = vxpose.xlu0.b32.cont [12/16] 0.0, 128
        %274 = vxpose.xlu0.b32.cont [13/16] 0.0, 128
        %275 = vxpose.xlu0.b32.cont [14/16] 0.0, 128
        %276 = vxpose.xlu0.b32.cont [15/16] 0.0, 128
        %277 = vxpose.xlu0.b32.end [16/16] 0.0, 128
        %v278 = vpop.trf.xlu0
        %v279 = vpop.trf.xlu0
        %v280 = vpop.trf.xlu0
        %v281 = vpop.trf.xlu0
        %v282 = vpop.trf.xlu0
        %v283 = vpop.trf.xlu0
        %v284 = vpop.trf.xlu0
        %v285 = vpop.trf.xlu0
        %v286 = vpop.trf.xlu0
        %v287 = vpop.trf.xlu0
        %v288 = vpop.trf.xlu0
        %v289 = vpop.trf.xlu0
        %v290 = vpop.trf.xlu0
        %v291 = vpop.trf.xlu0
        %v292 = vpop.trf.xlu0
        %v293 = vpop.trf.xlu0
        %294 = vxpose.xlu0.b32.start [1/16] %v197, 128
        %295 = vxpose.xlu0.b32.cont [2/16] 0.0, 128
        %296 = vxpose.xlu0.b32.cont [3/16] 0.0, 128
        %297 = vxpose.xlu0.b32.cont [4/16] 0.0, 128
        %298 = vxpose.xlu0.b32.cont [5/16] 0.0, 128
        %299 = vxpose.xlu0.b32.cont [6/16] 0.0, 128
        %300 = vxpose.xlu0.b32.cont [7/16] 0.0, 128
        %301 = vxpose.xlu0.b32.cont [8/16] 0.0, 128
        %302 = vxpose.xlu0.b32.cont [9/16] 0.0, 128
        %303 = vxpose.xlu0.b32.cont [10/16] 0.0, 128
        %304 = vxpose.xlu0.b32.cont [11/16] 0.0, 128
        %305 = vxpose.xlu0.b32.cont [12/16] 0.0, 128
        %306 = vxpose.xlu0.b32.cont [13/16] 0.0, 128
        %307 = vxpose.xlu0.b32.cont [14/16] 0.0, 128
        %308 = vxpose.xlu0.b32.cont [15/16] 0.0, 128
        %309 = vxpose.xlu0.b32.end [16/16] 0.0, 128
        %v310 = vpop.trf.xlu0
        %v311 = vpop.trf.xlu0
        %v312 = vpop.trf.xlu0
        %v313 = vpop.trf.xlu0
        %v314 = vpop.trf.xlu0
        %v315 = vpop.trf.xlu0
        %v316 = vpop.trf.xlu0
        %v317 = vpop.trf.xlu0
        %v318 = vpop.trf.xlu0
        %v319 = vpop.trf.xlu0
        %v320 = vpop.trf.xlu0
        %v321 = vpop.trf.xlu0
        %v322 = vpop.trf.xlu0
        %v323 = vpop.trf.xlu0
        %v324 = vpop.trf.xlu0
        %v325 = vpop.trf.xlu0
        %vm326 = vcmask 39936
        %327 = vst.msk [vmem:[#allocation2] sm:$0xff] %vm326, %v214
        %328 = vst.msk [vmem:[#allocation2 + $0x8] sm:$0xff] %vm326, %v215
        %329 = vst.msk [vmem:[#allocation2 + $0x10] sm:$0xff] %vm326, %v246
        %330 = vst.msk [vmem:[#allocation2 + $0x18] sm:$0xff] %vm326, %v247
        %331 = vst.msk [vmem:[#allocation2 + $0x20] sm:$0xff] %vm326, %v278
        %332 = vst.msk [vmem:[#allocation2 + $0x28] sm:$0xff] %vm326, %v279
        %333 = vst.msk [vmem:[#allocation2 + $0x30] sm:$0xff] %vm326, %v310
        %334 = vst.msk [vmem:[#allocation2 + $0x38] sm:$0xff] %vm326, %v311
        %v335 = vld [vmem:[#allocation2] ss:$3 sm:$0x1f]
        %s336 = scalar_lea.vmem [#allocation2], 16
        %v337 = vld [vmem:[%s336] ss:$3 sm:$0x1f]
        %s338 = scalar_lea.vmem [#allocation2], 32
        %v339 = vld [vmem:[%s338] ss:$3 sm:$0x1f]
        %s340 = scalar_lea.vmem [#allocation2], 48
        %v341 = vld [vmem:[%s340] ss:$3 sm:$0x1f]
        %s342 = scalar_lea.vmem [#allocation2], 1
        %v343 = vld [vmem:[%s342] ss:$3 sm:$0x1f]
        %s344 = scalar_lea.vmem [#allocation2], 17
        %v345 = vld [vmem:[%s344] ss:$3 sm:$0x1f]
        %s346 = scalar_lea.vmem [#allocation2], 33
        %v347 = vld [vmem:[%s346] ss:$3 sm:$0x1f]
        %s348 = scalar_lea.vmem [#allocation2], 49
        %v349 = vld [vmem:[%s348] ss:$3 sm:$0x1f]
        %s350 = scalar_lea.vmem [#allocation2], 2
        %v351 = vld [vmem:[%s350] ss:$3 sm:$0x1f]
        %s352 = scalar_lea.vmem [#allocation2], 18
        %v353 = vld [vmem:[%s352] ss:$3 sm:$0x1f]
        %s354 = scalar_lea.vmem [#allocation2], 34
        %v355 = vld [vmem:[%s354] ss:$3 sm:$0x1f]
        %s356 = scalar_lea.vmem [#allocation2], 50
        %v357 = vld [vmem:[%s356] ss:$3 sm:$0x1f]
        %v358 = vmax.f32 %v335, %v343
        %v359 = vmax.f32 %v337, %v345
        %v360 = vmax.f32 %v339, %v347
        %v361 = vmax.f32 %v341, %v349
        %v362 = vmax.f32 %v358, %v351
        %v363 = vmax.f32 %v359, %v353
        %v364 = vmax.f32 %v360, %v355
        %v365 = vmax.f32 %v361, %v357
        %366 = vxpose.xlu0.b32.start [1/16] %v362, 128
        %367 = vxpose.xlu0.b32.cont [2/16] 0.0, 128
        %368 = vxpose.xlu0.b32.cont [3/16] 0.0, 128
        %369 = vxpose.xlu0.b32.cont [4/16] 0.0, 128
        %370 = vxpose.xlu0.b32.cont [5/16] 0.0, 128
        %371 = vxpose.xlu0.b32.cont [6/16] 0.0, 128
        %372 = vxpose.xlu0.b32.cont [7/16] 0.0, 128
        %373 = vxpose.xlu0.b32.cont [8/16] 0.0, 128
        %374 = vxpose.xlu0.b32.cont [9/16] 0.0, 128
        %375 = vxpose.xlu0.b32.cont [10/16] 0.0, 128
        %376 = vxpose.xlu0.b32.cont [11/16] 0.0, 128
        %377 = vxpose.xlu0.b32.cont [12/16] 0.0, 128
        %378 = vxpose.xlu0.b32.cont [13/16] 0.0, 128
        %379 = vxpose.xlu0.b32.cont [14/16] 0.0, 128
        %380 = vxpose.xlu0.b32.cont [15/16] 0.0, 128
        %381 = vxpose.xlu0.b32.end [16/16] 0.0, 128
        %v382 = vpop.trf.xlu0
        %v383 = vpop.trf.xlu0
        %v384 = vpop.trf.xlu0
        %v385 = vpop.trf.xlu0
        %v386 = vpop.trf.xlu0
        %v387 = vpop.trf.xlu0
        %v388 = vpop.trf.xlu0
        %v389 = vpop.trf.xlu0
        %v390 = vpop.trf.xlu0
        %v391 = vpop.trf.xlu0
        %v392 = vpop.trf.xlu0
        %v393 = vpop.trf.xlu0
        %v394 = vpop.trf.xlu0
        %v395 = vpop.trf.xlu0
        %v396 = vpop.trf.xlu0
        %v397 = vpop.trf.xlu0
        %398 = vxpose.xlu0.b32.start [1/16] %v363, 128
        %399 = vxpose.xlu0.b32.cont [2/16] 0.0, 128
        %400 = vxpose.xlu0.b32.cont [3/16] 0.0, 128
        %401 = vxpose.xlu0.b32.cont [4/16] 0.0, 128
        %402 = vxpose.xlu0.b32.cont [5/16] 0.0, 128
        %403 = vxpose.xlu0.b32.cont [6/16] 0.0, 128
        %404 = vxpose.xlu0.b32.cont [7/16] 0.0, 128
        %405 = vxpose.xlu0.b32.cont [8/16] 0.0, 128
        %406 = vxpose.xlu0.b32.cont [9/16] 0.0, 128
        %407 = vxpose.xlu0.b32.cont [10/16] 0.0, 128
        %408 = vxpose.xlu0.b32.cont [11/16] 0.0, 128
        %409 = vxpose.xlu0.b32.cont [12/16] 0.0, 128
        %410 = vxpose.xlu0.b32.cont [13/16] 0.0, 128
        %411 = vxpose.xlu0.b32.cont [14/16] 0.0, 128
        %412 = vxpose.xlu0.b32.cont [15/16] 0.0, 128
        %413 = vxpose.xlu0.b32.end [16/16] 0.0, 128
        %v414 = vpop.trf.xlu0
        %v415 = vpop.trf.xlu0
        %v416 = vpop.trf.xlu0
        %v417 = vpop.trf.xlu0
        %v418 = vpop.trf.xlu0
        %v419 = vpop.trf.xlu0
        %v420 = vpop.trf.xlu0
        %v421 = vpop.trf.xlu0
        %v422 = vpop.trf.xlu0
        %v423 = vpop.trf.xlu0
        %v424 = vpop.trf.xlu0
        %v425 = vpop.trf.xlu0
        %v426 = vpop.trf.xlu0
        %v427 = vpop.trf.xlu0
        %v428 = vpop.trf.xlu0
        %v429 = vpop.trf.xlu0
        %430 = vxpose.xlu0.b32.start [1/16] %v364, 128
        %431 = vxpose.xlu0.b32.cont [2/16] 0.0, 128
        %432 = vxpose.xlu0.b32.cont [3/16] 0.0, 128
        %433 = vxpose.xlu0.b32.cont [4/16] 0.0, 128
        %434 = vxpose.xlu0.b32.cont [5/16] 0.0, 128
        %435 = vxpose.xlu0.b32.cont [6/16] 0.0, 128
        %436 = vxpose.xlu0.b32.cont [7/16] 0.0, 128
        %437 = vxpose.xlu0.b32.cont [8/16] 0.0, 128
        %438 = vxpose.xlu0.b32.cont [9/16] 0.0, 128
        %439 = vxpose.xlu0.b32.cont [10/16] 0.0, 128
        %440 = vxpose.xlu0.b32.cont [11/16] 0.0, 128
        %441 = vxpose.xlu0.b32.cont [12/16] 0.0, 128
        %442 = vxpose.xlu0.b32.cont [13/16] 0.0, 128
        %443 = vxpose.xlu0.b32.cont [14/16] 0.0, 128
        %444 = vxpose.xlu0.b32.cont [15/16] 0.0, 128
        %445 = vxpose.xlu0.b32.end [16/16] 0.0, 128
        %v446 = vpop.trf.xlu0
        %v447 = vpop.trf.xlu0
        %v448 = vpop.trf.xlu0
        %v449 = vpop.trf.xlu0
        %v450 = vpop.trf.xlu0
        %v451 = vpop.trf.xlu0
        %v452 = vpop.trf.xlu0
        %v453 = vpop.trf.xlu0
        %v454 = vpop.trf.xlu0
        %v455 = vpop.trf.xlu0
        %v456 = vpop.trf.xlu0
        %v457 = vpop.trf.xlu0
        %v458 = vpop.trf.xlu0
        %v459 = vpop.trf.xlu0
        %v460 = vpop.trf.xlu0
        %v461 = vpop.trf.xlu0
        %462 = vxpose.xlu0.b32.start [1/16] %v365, 128
        %463 = vxpose.xlu0.b32.cont [2/16] 0.0, 128
        %464 = vxpose.xlu0.b32.cont [3/16] 0.0, 128
        %465 = vxpose.xlu0.b32.cont [4/16] 0.0, 128
        %466 = vxpose.xlu0.b32.cont [5/16] 0.0, 128
        %467 = vxpose.xlu0.b32.cont [6/16] 0.0, 128
        %468 = vxpose.xlu0.b32.cont [7/16] 0.0, 128
        %469 = vxpose.xlu0.b32.cont [8/16] 0.0, 128
        %470 = vxpose.xlu0.b32.cont [9/16] 0.0, 128
        %471 = vxpose.xlu0.b32.cont [10/16] 0.0, 128
        %472 = vxpose.xlu0.b32.cont [11/16] 0.0, 128
        %473 = vxpose.xlu0.b32.cont [12/16] 0.0, 128
        %474 = vxpose.xlu0.b32.cont [13/16] 0.0, 128
        %475 = vxpose.xlu0.b32.cont [14/16] 0.0, 128
        %476 = vxpose.xlu0.b32.cont [15/16] 0.0, 128
        %477 = vxpose.xlu0.b32.end [16/16] 0.0, 128
        %v478 = vpop.trf.xlu0
        %v479 = vpop.trf.xlu0
        %v480 = vpop.trf.xlu0
        %v481 = vpop.trf.xlu0
        %v482 = vpop.trf.xlu0
        %v483 = vpop.trf.xlu0
        %v484 = vpop.trf.xlu0
        %v485 = vpop.trf.xlu0
        %v486 = vpop.trf.xlu0
        %v487 = vpop.trf.xlu0
        %v488 = vpop.trf.xlu0
        %v489 = vpop.trf.xlu0
        %v490 = vpop.trf.xlu0
        %v491 = vpop.trf.xlu0
        %v492 = vpop.trf.xlu0
        %v493 = vpop.trf.xlu0
        %vm494 = vcmask 36864
        %495 = vst.msk [vmem:[%s165] sm:$0x1f] %vm494, %v382
        %496 = vst.msk [vmem:[%s165 + $0x8] sm:$0x1f] %vm494, %v414
        %497 = vst.msk [vmem:[%s165 + $0x10] sm:$0x1f] %vm494, %v446
        %498 = vst.msk [vmem:[%s165 + $0x18] sm:$0x1f] %vm494, %v478
        %s499 = smul.u32 4, %s19
        %p500 = scmp.lt.s32.totalorder %s499, 7
        %s501 = scalar_select %p500, %s499, 7
        %p502 = scmp.lt.s32.totalorder %s20, 0
        %s503 = scalar_select %p502, %s20, 0
        %s504 = sadd.s32 %s503, %s501
        %s505 = smul.addr %s504, 8
        %s506 = scalar_lea.vmem %s1, %s505
        // Predicated region
        $region29: #{tpu_custom_call.1} parent=23 // pred_check
          %p507 = pneg %p75
        $region30: #{tpu_custom_call.1} parent=23 // pred_check_branch
          %509 = sbr.rel (%p507) target = $region32
        $region31: #{tpu_custom_call.1} parent=23 // pred_region
          %s510 = smul.u32 4, %s19
        $region32: #{tpu_custom_call.1} parent=23 // pred_fallthru
          _
      $region24: #{tpu_custom_call.1} parent=5 // pred_fallthru
        _
      %p511 = scmp.le.s32.totalorder 2, %s10
      // Predicated region
      $region33: #{tpu_custom_call.1} parent=5 // pred_check
        %p512 = pneg %p511
      $region34: #{tpu_custom_call.1} parent=5 // pred_check_branch
        %514 = sbr.rel (%p512) target = $region36
      $region35: #{tpu_custom_call.1} parent=5 // pred_region
        %s515 = ssub.s32 %s10, 2
        // Predicated region
        $region37: #{tpu_custom_call.1} parent=35 // pred_check
          %p516 = pneg %p81
        $region38: #{tpu_custom_call.1} parent=35 // pred_check_branch
          %518 = sbr.rel (%p516) target = $region40
        $region39: #{tpu_custom_call.1} parent=35 // pred_region
          %s519 = smul.u32 4, %s21
          %p520 = scmp.lt.s32.totalorder %s519, 7
          %s521 = scalar_select %p520, %s519, 7
          %p522 = scmp.lt.s32.totalorder %s22, 0
          %s523 = scalar_select %p522, %s22, 0
          %s524 = sadd.s32 %s523, %s521
          %s525 = smul.addr %s524, 8
          %s526 = scalar_lea.vmem %s1, %s525
        $region40: #{tpu_custom_call.1} parent=35 // pred_fallthru
          _
      $region36: #{tpu_custom_call.1} parent=5 // pred_fallthru
        _
    $region6: #{tpu_custom_call.1} parent=1 // loop_footer
      %s14 = sadd.s32 1, %s10
    $region7: #{tpu_custom_call.1} parent=1 // loop_footer_branch
      %9 = sbr.rel target = $region3
    $region8: #{tpu_custom_call.1} parent=1 // loop_exit
      _
    %527 = vsyncpa [#allocation4], 1
    %s528 = scalar_lea.sflag [#allocation4], 1
    %529 = vsyncpa %s528, 1

</llo_original>
